<compile_context>
chip_gen: v7x
topology: tpu7x:2x2x1
jax: 0.10.0
libtpu: 0.0.40
codegen_flags: <defaults>
</compile_context>

<pallas_src>
import functools

import jax
import jax.numpy as jnp
from jax import lax
from jax.experimental import pallas as pl
from jax.experimental.pallas import tpu as pltpu


def _focal_loss_kernel(alpha_ref, preds_ref, masks_ref, *rest,
                       gamma, tm, tl, has_weight, binary_masks):
    if has_weight:
        weight_ref, out_ref = rest
    else:
        weight_ref = None
        (out_ref,) = rest

    j = pl.program_id(1)

    # New row-block: reset this block's resident (8,128) partial. j (lane
    # tiles) is the reduction axis and is last / "arbitrary"; i is "parallel".
    @pl.when(j == 0)
    def _():
        out_ref[...] = jnp.zeros_like(out_ref)

    n_strips = tm // 8
    n_groups = tl // 128

    partial = jnp.zeros((8, 128), jnp.float32)

    # Strip-wise fused compute + reduce: never materialize the (tm, tl) loss.
    for r in range(n_strips):
        r0, r1 = r * 8, (r + 1) * 8

        p = jnp.clip(preds_ref[r0:r1, :].astype(jnp.float32), 1e-07, 1.0 - 1e-07)
        m = masks_ref[r0:r1, :].astype(jnp.float32)

        if binary_masks:
            # Masks guaranteed {0,1}: single log / single pow.
            pt = jnp.where(m > 0.5, p, 1.0 - p)
            log_pt = jnp.log(pt)
            if isinstance(gamma, int):
                pow_term = lax.integer_pow(1.0 - pt, gamma)       # pure VPU
            else:
                pow_term = jnp.exp(jnp.float32(gamma) * jnp.log(1.0 - pt))
            term = pow_term * log_pt
        else:
            one_minus_p = 1.0 - p
            log_p = jnp.log(p)
            log_1mp = jnp.log(one_minus_p)
            if isinstance(gamma, int):
                pow_1mp = lax.integer_pow(one_minus_p, gamma)     # pure VPU
                pow_p = lax.integer_pow(p, gamma)
            else:
                g = jnp.float32(gamma)                            # reuse logs
                pow_1mp = jnp.exp(g * log_1mp)
                pow_p = jnp.exp(g * log_p)
            term = m * pow_1mp * log_p + (1.0 - m) * pow_p * log_1mp

        if weight_ref is not None:
            term = term * weight_ref[r0:r1, :].astype(jnp.float32)

        # Lane-group reduce (8, tl) -> (8, 128): tile-aligned VPU adds only.
        red = term[:, 0:128]
        for c in range(1, n_groups):
            red = red + term[:, c * 128:(c + 1) * 128]

        # Deferred (-alpha) multiply: one (8,1)->(8,128) broadcast-mul per
        # strip (padded rows have alpha == 0 -> exact zero contribution).
        partial = partial + alpha_ref[r0:r1, :] * red

    out_ref[...] += partial


def _round_up(x, m):
    return (x + m - 1) // m * m


def _pick_tile(dim, base, target):
    """Largest multiple of `base` that divides `dim` and is <= target.
    `dim` is always a multiple of `base` here (wrapper pads)."""
    best = base
    t = base
    limit = min(dim, max(base, target))
    while t <= limit:
        if dim % t == 0:
            best = t
        t += base
    return best


def _tile_defaults():
    """Generation-gated tile targets / VMEM budget."""
    try:
        cap = int(pltpu.get_tpu_info().vmem_capacity_bytes)
    except Exception:
        cap = 64 * 1024 * 1024
    if cap >= 96 * 1024 * 1024:           # v5e / v6e (128 MiB VMEM)
        return 256, 4096, 96 * 1024 * 1024
    return 256, 2048, 48 * 1024 * 1024    # v7x (64 MiB) or unknown


def focal_loss_pallas(preds, masks, alpha, weight=None, gamma=2, *,
                      binary_masks=False, tm_target=None, tl_target=None):
    """Mean focal loss over NCHW preds/masks; alpha is the per-class (C,) weights.

    masks / weight may be any dtype (uint8 masks, bf16 weight stream narrow
    and are upcast in-kernel). Set binary_masks=True only when masks are
    strictly {0,1}.
    """
    N, C, H, W = preds.shape
    M, L = N * C, H * W
    total_elems = M * L                     # mean denominator: ORIGINAL size

    tm_def, tl_def, vmem_limit = _tile_defaults()
    tm_target = tm_def if tm_target is None else tm_target
    tl_target = tl_def if tl_target is None else tl_target

    preds2 = preds.reshape(M, L)
    masks2 = masks.reshape(M, L)
    if masks2.dtype == jnp.bool_:
        masks2 = masks2.astype(jnp.uint8)   # avoid bool refs; still 1 B/elem
    w2 = None if weight is None else weight.reshape(M, L)

    # (-alpha) per row; negation folded in so the kernel does a plain FMA.
    neg_alpha = -jnp.asarray(alpha, dtype=jnp.float32).reshape(1, C)
    alpha_col = jnp.broadcast_to(neg_alpha, (N, C)).reshape(M, 1)

    # Pad to (8, 128) alignment. Row pads are exact zeros via alpha==0; lane
    # pads use masks/weight=0 and preds=0 (clipped to 1e-7 -> ~1e-21/elem).
    Mp, Lp = _round_up(M, 8), _round_up(L, 128)
    if (Mp, Lp) != (M, L):
        pad = ((0, Mp - M), (0, Lp - L))
        preds2 = jnp.pad(preds2, pad)
        masks2 = jnp.pad(masks2, pad)
        if w2 is not None:
            w2 = jnp.pad(w2, pad)
        alpha_col = jnp.pad(alpha_col, ((0, Mp - M), (0, 0)))

    tm = _pick_tile(Mp, 8, tm_target)
    tl = _pick_tile(Lp, 128, tl_target)
    ni, nj = Mp // tm, Lp // tl

    in_specs = [
        pl.BlockSpec((tm, 1), lambda i, j: (i, 0)),    # -alpha column
        pl.BlockSpec((tm, tl), lambda i, j: (i, j)),   # preds
        pl.BlockSpec((tm, tl), lambda i, j: (i, j)),   # masks
    ]
    operands = [alpha_col, preds2, masks2]
    has_weight = w2 is not None
    if has_weight:
        in_specs.append(pl.BlockSpec((tm, tl), lambda i, j: (i, j)))
        operands.append(w2)
    # TODO(synk): sweep pipeline_mode=pl.Buffered(3) on the streamed specs if
    #             xprof shows exposed DMA after the tile bump.

    kernel = functools.partial(
        _focal_loss_kernel, gamma=gamma, tm=tm, tl=tl,
        has_weight=has_weight, binary_masks=binary_masks)

    partials = pl.pallas_call(
        kernel,
        out_shape=jax.ShapeDtypeStruct((ni * 8, 128), jnp.float32),
        grid_spec=pltpu.PrefetchScalarGridSpec(
            num_scalar_prefetch=0,
            grid=(ni, nj),
            in_specs=in_specs,
            out_specs=pl.BlockSpec((8, 128), lambda i, j: (i, 0)),
        ),
        compiler_params=pltpu.CompilerParams(
            dimension_semantics=("parallel", "arbitrary"),
            vmem_limit_bytes=vmem_limit),
    )(*operands)

    # Tiny lane-dense (ni*8, 128) partial slab: finish the mean host-side.
    return jnp.sum(partials) / jnp.float32(total_elems)


def focal_loss_ref(preds, masks, alpha, weight=None, gamma=2):
    """Plain-JAX reference mirroring the PyTorch forward."""
    if weight is None:
        weight = jnp.ones_like(preds)
    a = jnp.asarray(alpha, jnp.float32).reshape(1, -1, 1, 1)
    p = jnp.clip(preds.astype(jnp.float32), 1e-07, 1 - 1e-07)
    m = masks.astype(jnp.float32)
    w = weight.astype(jnp.float32)
    loss = -w * a * m * (1 - p) ** gamma * jnp.log(p)
    loss += -w * a * (1 - m) * p ** gamma * jnp.log(1 - p)
    return jnp.mean(loss)


if __name__ == "__main__":
    key = jax.random.PRNGKey(0)
    ks = jax.random.split(key, 8)

    # ---- canonical small shape --------------------------------------------
    N, C, H, W = 2, 4, 16, 16
    alpha = jnp.ones((C,), dtype=jnp.float32)   # __init__(alpha=None) default
    gamma = 2

    preds = jax.nn.sigmoid(jax.random.normal(ks[0], (N, C, H, W), dtype=jnp.float32))
    masks = (jax.random.uniform(ks[1], (N, C, H, W)) > 0.5).astype(jnp.float32)
    weight = jax.random.uniform(ks[2], (N, C, H, W), dtype=jnp.float32) + 0.5

    # 1) weighted path
    out_w = jax.block_until_ready(focal_loss_pallas(preds, masks, alpha, weight, gamma))
    ref_w = focal_loss_ref(preds, masks, alpha, weight, gamma)
    assert jnp.allclose(out_w, ref_w, atol=1e-5, rtol=1e-5), (out_w, ref_w)

    # 2) weight=None fast path (no ones tensor streamed)
    out_n = jax.block_until_ready(focal_loss_pallas(preds, masks, alpha, None, gamma))
    ref_n = focal_loss_ref(preds, masks, alpha, None, gamma)
    assert jnp.allclose(out_n, ref_n, atol=1e-5, rtol=1e-5), (out_n, ref_n)

    # 3) binary-mask fast path (single log / single pow)
    out_b = jax.block_until_ready(
        focal_loss_pallas(preds, masks, alpha, None, gamma, binary_masks=True))
    assert jnp.allclose(out_b, ref_n, atol=1e-5, rtol=1e-5), (out_b, ref_n)

    # 4) narrow (uint8) masks streamed as-is
    N2, C2 = 8, 4
    preds2 = jax.nn.sigmoid(jax.random.normal(ks[3], (N2, C2, H, W), dtype=jnp.float32))
    masks_u8 = (jax.random.uniform(ks[4], (N2, C2, H, W)) > 0.5).astype(jnp.uint8)
    alpha2 = jnp.ones((C2,), dtype=jnp.float32)
    out_u8 = jax.block_until_ready(focal_loss_pallas(preds2, masks_u8, alpha2, None, gamma))
    ref_u8 = focal_loss_ref(preds2, masks_u8.astype(jnp.float32), alpha2, None, gamma)
    assert jnp.allclose(out_u8, ref_u8, atol=1e-5, rtol=1e-5), (out_u8, ref_u8)

    # 5) misaligned H*W (14x14) + odd channel count -> wrapper padding path,
    #    float gamma, non-uniform alpha, weighted.
    N3, C3, H3, W3 = 2, 3, 14, 14
    alpha3 = jnp.array([0.25, 0.5, 1.0], dtype=jnp.float32)
    preds3 = jax.nn.sigmoid(jax.random.normal(ks[5], (N3, C3, H3, W3), dtype=jnp.float32))
    masks3 = (jax.random.uniform(ks[6], (N3, C3, H3, W3)) > 0.5).astype(jnp.float32)
    weight3 = jax.random.uniform(ks[7], (N3, C3, H3, W3), dtype=jnp.float32) + 0.5
    out_p = jax.block_until_ready(focal_loss_pallas(preds3, masks3, alpha3, weight3, 2.0))
    ref_p = focal_loss_ref(preds3, masks3, alpha3, weight3, 2.0)
    assert jnp.allclose(out_p, ref_p, atol=1e-5, rtol=1e-5), (out_p, ref_p)

    # TODO(synk): torch's `assert not loss.isnan().sum()` checks are not
    #             ported; wrap calls in pl.enable_debug_checks() if needed.
    print("KERNEL_OK")
</pallas_src>

<mosaic_0001>
module attributes {stable_mosaic.version = 11 : i64} {
  func.func @_focal_loss_kernel(%arg0: i32, %arg1: i32, %arg2: memref<8x1xf32, #tpu.memory_space<vmem>>, %arg3: memref<8x256xf32, #tpu.memory_space<vmem>>, %arg4: memref<8x256xf32, #tpu.memory_space<vmem>>, %arg5: memref<8x256xf32, #tpu.memory_space<vmem>>, %arg6: memref<8x128xf32, #tpu.memory_space<vmem>>) attributes {dimension_semantics = [#tpu.dimension_semantics<parallel>, #tpu.dimension_semantics<arbitrary>], iteration_bounds = array<i64: 1, 1>, scalar_prefetch = 0 : i64, scratch_operands = 0 : i64, tpu.core_type = #tpu.core_type<tc>, window_params = [{transform_indices = @transform_0, window_bounds = array<i64: 8, 1>}, {transform_indices = @transform_1, window_bounds = array<i64: 8, 256>}, {transform_indices = @transform_2, window_bounds = array<i64: 8, 256>}, {transform_indices = @transform_3, window_bounds = array<i64: 8, 256>}, {transform_indices = @transform_4, window_bounds = array<i64: 8, 128>}]} {
    %c0_i32 = arith.constant 0 : i32
    %0 = arith.cmpi eq, %arg1, %c0_i32 : i32
    %1 = arith.extui %0 : i1 to i32
    %c0_i32_0 = arith.constant 0 : i32
    %2 = arith.cmpi ne, %1, %c0_i32_0 : i32
    scf.if %2 {
      %cst_16 = arith.constant 0.000000e+00 : f32
      %35 = vector.broadcast %cst_16 : f32 to vector<8x128xf32>
      %c0_17 = arith.constant 0 : index
      %c0_18 = arith.constant 0 : index
      %36 = vector.load %arg6[%c0_17, %c0_18] : memref<8x128xf32, #tpu.memory_space<vmem>>, vector<8x128xf32>
      tpu.vector_store %arg6[%c0_17, %c0_18], %35 {strides = array<i32>} : memref<8x128xf32, #tpu.memory_space<vmem>>, vector<8x128xf32>,
    } else {
    }
    %cst = arith.constant 0.000000e+00 : f32
    %3 = vector.broadcast %cst : f32 to vector<8x128xf32>
    %c0 = arith.constant 0 : index
    %c0_1 = arith.constant 0 : index
    %4 = vector.load %arg3[%c0, %c0_1] : memref<8x256xf32, #tpu.memory_space<vmem>>, vector<8x256xf32>
    %cst_2 = arith.constant 1.000000e-07 : f32
    %cst_3 = arith.constant 0.99999988 : f32
    %5 = vector.broadcast %cst_2 : f32 to vector<8x256xf32>
    %6 = arith.maximumf %5, %4 : vector<8x256xf32>
    %7 = vector.broadcast %cst_3 : f32 to vector<8x256xf32>
    %8 = arith.minimumf %7, %6 : vector<8x256xf32>
    %c0_4 = arith.constant 0 : index
    %c0_5 = arith.constant 0 : index
    %9 = vector.load %arg4[%c0_4, %c0_5] : memref<8x256xf32, #tpu.memory_space<vmem>>, vector<8x256xf32>
    %cst_6 = arith.constant 1.000000e+00 : f32
    %10 = vector.broadcast %cst_6 : f32 to vector<8x256xf32>
    %11 = arith.subf %10, %8 : vector<8x256xf32>
    %12 = math.log %8 : vector<8x256xf32>
    %13 = math.log %11 : vector<8x256xf32>
    %14 = arith.mulf %11, %11 : vector<8x256xf32>
    %15 = arith.mulf %8, %8 : vector<8x256xf32>
    %16 = arith.mulf %9, %14 : vector<8x256xf32>
    %17 = arith.mulf %16, %12 : vector<8x256xf32>
    %cst_7 = arith.constant 1.000000e+00 : f32
    %18 = vector.broadcast %cst_7 : f32 to vector<8x256xf32>
    %19 = arith.subf %18, %9 : vector<8x256xf32>
    %20 = arith.mulf %19, %15 : vector<8x256xf32>
    %21 = arith.mulf %20, %13 : vector<8x256xf32>
    %22 = arith.addf %17, %21 : vector<8x256xf32>
    %c0_8 = arith.constant 0 : index
    %c0_9 = arith.constant 0 : index
    %23 = vector.load %arg5[%c0_8, %c0_9] : memref<8x256xf32, #tpu.memory_space<vmem>>, vector<8x256xf32>
    %24 = arith.mulf %22, %23 : vector<8x256xf32>
    %25 = vector.extract_strided_slice %24 {offsets = [0, 0], sizes = [8, 128], strides = [1, 1]} : vector<8x256xf32> to vector<8x128xf32>
    %26 = vector.extract_strided_slice %24 {offsets = [0, 128], sizes = [8, 128], strides = [1, 1]} : vector<8x256xf32> to vector<8x128xf32>
    %27 = arith.addf %25, %26 : vector<8x128xf32>
    %c0_10 = arith.constant 0 : index
    %c0_11 = arith.constant 0 : index
    %28 = vector.load %arg2[%c0_10, %c0_11] : memref<8x1xf32, #tpu.memory_space<vmem>>, vector<8x1xf32>
    %29 = vector.broadcast %28 : vector<8x1xf32> to vector<8x128xf32>
    %30 = arith.mulf %29, %27 : vector<8x128xf32>
    %31 = arith.addf %3, %30 : vector<8x128xf32>
    %c0_12 = arith.constant 0 : index
    %c0_13 = arith.constant 0 : index
    %32 = vector.load %arg6[%c0_12, %c0_13] : memref<8x128xf32, #tpu.memory_space<vmem>>, vector<8x128xf32>
    %33 = arith.addf %32, %31 : vector<8x128xf32>
    %c0_14 = arith.constant 0 : index
    %c0_15 = arith.constant 0 : index
    %34 = vector.load %arg6[%c0_14, %c0_15] : memref<8x128xf32, #tpu.memory_space<vmem>>, vector<8x128xf32>
    tpu.vector_store %arg6[%c0_14, %c0_15], %33 {strides = array<i32>} : memref<8x128xf32, #tpu.memory_space<vmem>>, vector<8x128xf32>,
    return
  }
  func.func @transform_0(%arg0: i32, %arg1: i32) -> (i32, i32) {
    %c0_i32 = arith.constant 0 : i32
    %c0_i32_0 = arith.constant 0 : i32
    return %arg0, %c0_i32 : i32, i32
  }
  func.func @transform_1(%arg0: i32, %arg1: i32) -> (i32, i32) {
    %c0_i32 = arith.constant 0 : i32
    return %arg0, %arg1 : i32, i32
  }
  func.func @transform_2(%arg0: i32, %arg1: i32) -> (i32, i32) {
    %c0_i32 = arith.constant 0 : i32
    return %arg0, %arg1 : i32, i32
  }
  func.func @transform_3(%arg0: i32, %arg1: i32) -> (i32, i32) {
    %c0_i32 = arith.constant 0 : i32
    return %arg0, %arg1 : i32, i32
  }
  func.func @transform_4(%arg0: i32, %arg1: i32) -> (i32, i32) {
    %c0_i32 = arith.constant 0 : i32
    %c0_i32_0 = arith.constant 0 : i32
    return %arg0, %c0_i32 : i32, i32
  }
}

</mosaic_0001>

<llo_original>
// kernel: tpu_custom_call.1
$region0: #{tpu_custom_call.1}
  #allocation0 [shape = 'u32[]', space=smem, size = 0x4, offset = 0x4, fixed_abs, tag = 'smem constant byte address 0x4 - core index']
  #allocation1 [shape = 'u32[144,128]{1,0:T(1,128)}', space=vmem, size = 0x12000, scoped, tag = 'internal scratch']
  %s0 = inlined_call_operand.vmem [shape: f32[8,1], index: 0, kind: input, shape index: {}]
  %s1 = inlined_call_operand.hbm [shape: f32[8,256], index: 1, kind: input, shape index: {}]
  %s2 = inlined_call_operand.vmem [shape: f32[8,256], index: 2, kind: input, shape index: {}]
  %s3 = inlined_call_operand.hbm [shape: f32[8,256], index: 3, kind: input, shape index: {}]
  %s4 = inlined_call_operand.hbm [shape: f32[8,128], index: 4, kind: output, shape index: {}]
  %s5 = sld [smem:[#allocation0]]
  $region38: #{tpu_custom_call.1} parent=0
    _
  %s7 = ssub.s32 1, %s5
  %s8 = scalar_select 0, %s7, %s5
  $region1: #{tpu_custom_call.1} parent=0
    #allocation2 [shape = 'u8[8192]{0}', space=vmem, size = 0x2000, scoped, tag = 'input window, operand 1, single buffered']
    #allocation3 [shape = 's32[1]{0}', space=sflag, size = 0x4, scoped, tag = 'scoped memory for tpu_custom_call.1']
    #allocation4 [shape = 's32[1]{0}', space=sflag, size = 0x4, scoped, tag = 'scoped memory for tpu_custom_call.1']
    #allocation5 [shape = 'u8[8192]{0}', space=vmem, size = 0x2000, scoped, tag = 'input window, operand 3, single buffered']
    #allocation6 [shape = 's32[1]{0}', space=sflag, size = 0x4, scoped, tag = 'scoped memory for tpu_custom_call.1']
    #allocation7 [shape = 'u8[4096]{0}', space=vmem, size = 0x1000, scoped, tag = 'output window, operand 0, single buffered']
    %9 = vsyncpa [#allocation3], 0
    %10 = vsyncpa [#allocation6], 0
    %11 = vsyncpa [#allocation4], 0
    // Predicated region
    $region2: #{tpu_custom_call.1} parent=1 // pred_check
      _
    $region3: #{tpu_custom_call.1} parent=1 // pred_check_branch
      %13 = sbr.rel (0) target = $region5
    $region4: #{tpu_custom_call.1} parent=1 // pred_region
      _
    $region5: #{tpu_custom_call.1} parent=1 // pred_fallthru
      _
    // Predicated region
    $region6: #{tpu_custom_call.1} parent=1 // pred_check
      _
    $region7: #{tpu_custom_call.1} parent=1 // pred_check_branch
      %15 = sbr.rel (0) target = $region9
    $region8: #{tpu_custom_call.1} parent=1 // pred_region
      %s17 = ssub.s32 256, 256
      %18 = vsyncadd [#allocation3], %s17
      %s20 = sshll.u32 [#allocation2], 4
      %s21 = int_to_ptr.vmem [resolvable:$true] %s20
      %23 = dma.hbm_to_vmem [thread:$0]  %s1, 256, %s21, [#allocation3]
    $region9: #{tpu_custom_call.1} parent=1 // pred_fallthru
      _
    // Predicated region
    $region10: #{tpu_custom_call.1} parent=1 // pred_check
      _
    $region11: #{tpu_custom_call.1} parent=1 // pred_check_branch
      %25 = sbr.rel (0) target = $region13
    $region12: #{tpu_custom_call.1} parent=1 // pred_region
      _
    $region13: #{tpu_custom_call.1} parent=1 // pred_fallthru
      _
    // Predicated region
    $region14: #{tpu_custom_call.1} parent=1 // pred_check
      _
    $region15: #{tpu_custom_call.1} parent=1 // pred_check_branch
      %27 = sbr.rel (0) target = $region17
    $region16: #{tpu_custom_call.1} parent=1 // pred_region
      %s29 = ssub.s32 256, 256
      %30 = vsyncadd [#allocation6], %s29
      %s32 = sshll.u32 [#allocation5], 4
      %s33 = int_to_ptr.vmem [resolvable:$true] %s32
      %35 = dma.hbm_to_vmem [thread:$0]  %s3, 256, %s33, [#allocation6]
    $region17: #{tpu_custom_call.1} parent=1 // pred_fallthru
      _
    // Predicated region
    $region18: #{tpu_custom_call.1} parent=1 // pred_check
      _
    $region19: #{tpu_custom_call.1} parent=1 // pred_check_branch
      %37 = sbr.rel (0) target = $region21
    $region20: #{tpu_custom_call.1} parent=1 // pred_region
      %38 = dma.done [#allocation3], 256
    $region21: #{tpu_custom_call.1} parent=1 // pred_fallthru
      _
    // Predicated region
    $region22: #{tpu_custom_call.1} parent=1 // pred_check
      _
    $region23: #{tpu_custom_call.1} parent=1 // pred_check_branch
      %40 = sbr.rel (0) target = $region25
    $region24: #{tpu_custom_call.1} parent=1 // pred_region
      %41 = dma.done [#allocation6], 256
    $region25: #{tpu_custom_call.1} parent=1 // pred_fallthru
      _
    %p42 = scmp.eq.s32.totalorder 0, 0
    // Predicated region
    $region26: #{tpu_custom_call.1} parent=1 // pred_check
      %p43 = pneg %p42
    $region27: #{tpu_custom_call.1} parent=1 // pred_check_branch
      %45 = sbr.rel (%p43) target = $region29
    $region28: #{tpu_custom_call.1} parent=1 // pred_region
      %46 = vst [vmem:[#allocation7] sm:$0xff] 0.0
    $region29: #{tpu_custom_call.1} parent=1 // pred_fallthru
      _
    %v47 = vld [vmem:[#allocation2] sm:$0xff]
    %v48 = vld [vmem:[#allocation2 + $0x8] sm:$0xff]
    %v49 = vmax.f32 %v47, 1e-07
    %v50 = vmax.f32 %v48, 1e-07
    %v51 = vmin.f32 %v49, 0.9999999
    %v52 = vmin.f32 %v50, 0.9999999
    %v53 = vld [vmem:[%s2] sm:$0xff]
    %v54 = vld [vmem:[%s2 + $0x8] sm:$0xff]
    %v55 = vsub.f32 1.0, %v51
    %v56 = vsub.f32 1.0, %v52
    %v57 = vlog2.pop %v51
    %v58 = vmul.f32 %v57, 0.6931472
    %v59 = vlog2.pop %v52
    %v60 = vmul.f32 %v59, 0.6931472
    %v61 = vlog2.pop %v55
    %v62 = vmul.f32 %v61, 0.6931472
    %v63 = vlog2.pop %v56
    %v64 = vmul.f32 %v63, 0.6931472
    %v65 = vmul.f32 %v55, %v55
    %v66 = vmul.f32 %v56, %v56
    %v67 = vmul.f32 %v51, %v51
    %v68 = vmul.f32 %v52, %v52
    %v69 = vmul.f32 %v53, %v65
    %v70 = vmul.f32 %v54, %v66
    %v71 = vmul.f32 %v69, %v58
    %v72 = vmul.f32 %v70, %v60
    %v73 = vsub.f32 1.0, %v53
    %v74 = vsub.f32 1.0, %v54
    %v75 = vmul.f32 %v73, %v67
    %v76 = vmul.f32 %v74, %v68
    %v77 = vmul.f32 %v75, %v62
    %v78 = vmul.f32 %v76, %v64
    %v79 = vadd.f32 %v71, %v77
    %v80 = vadd.f32 %v72, %v78
    %v81 = vld [vmem:[#allocation5] sm:$0xff]
    %v82 = vld [vmem:[#allocation5 + $0x8] sm:$0xff]
    %v83 = vmul.f32 %v79, %v81
    %v84 = vmul.f32 %v80, %v82
    %v85 = vadd.f32 %v83, %v84
    %v86 = vld [vmem:[%s0] sm:$0xff]
    %88 = vset.pattern.permute.xlu0 0
    %89 = vperm.xlu0 %88, %v86
    %v90 = vpop.permute.xlu0 %89
    %v92 = vmul.f32 %v90, %v85
    %v93 = vadd.f32 %v92, 0.0
    %v94 = vld [vmem:[#allocation7] sm:$0xff]
    %v95 = vadd.f32 %v94, %v93
    %96 = vst [vmem:[#allocation7] sm:$0xff] %v95
    // Predicated region
    $region30: #{tpu_custom_call.1} parent=1 // pred_check
      _
    $region31: #{tpu_custom_call.1} parent=1 // pred_check_branch
      %98 = sbr.rel (0) target = $region33
    $region32: #{tpu_custom_call.1} parent=1 // pred_region
      %s100 = ssub.s32 128, 128
      %101 = vsyncadd [#allocation4], %s100
      %s103 = sshll.u32 [#allocation7], 4
      %s104 = int_to_ptr.vmem [resolvable:$true] %s103
      %106 = dma.vmem_to_hbm [thread:$0]  %s104, 128, %s4, [#allocation4]
    $region33: #{tpu_custom_call.1} parent=1 // pred_fallthru
      _
    // Predicated region
    $region34: #{tpu_custom_call.1} parent=1 // pred_check
      _
    $region35: #{tpu_custom_call.1} parent=1 // pred_check_branch
      %108 = sbr.rel (0) target = $region37
    $region36: #{tpu_custom_call.1} parent=1 // pred_region
      %109 = dma.done [#allocation4], 128
    $region37: #{tpu_custom_call.1} parent=1 // pred_fallthru
      _
    %110 = vsyncpa [#allocation3], 1
    %111 = vsyncpa [#allocation6], 1
    %112 = vsyncpa [#allocation4], 1

</llo_original>
